<compile_context>
chip_gen: v6e
topology: v6e:2x2x1
jax: 0.10.0
libtpu: 0.0.40
codegen_flags: <defaults>
</compile_context>

<pallas_src>
import jax
import jax.numpy as jnp
from jax import lax
from jax.experimental import pallas as pl
from jax.experimental.pallas import tpu as pltpu

EPS = 1e-12  # matches torch.nn.functional.normalize default eps


# ----------------------------------------------------------------------------
# Pallas kernel: cosine similarity against cached normalized keys, top-1 select
# expressed as a one-hot selector matmul:  P_flat[b, :] = p_flat[argmax_k cos[b,k], :]
# ----------------------------------------------------------------------------
def dualprompt_e_kernel(x_ref, nk_ref, pf_ref, o_ref):
    x = x_ref[...]          # (TB, D)      f32
    n_K = nk_ref[...]       # (pool, D)    f32   pre-normalized keys (hoisted)
    p_flat = pf_ref[...]    # (pool, L*E)  f32

    # q = x / max(||x||, eps) -- one EUP rsqrt; clamp applied to the squared norm
    # (differs from torch only for norms in [1e-24, 1e-12]; argmax is scale-invariant anyway).
    nrm2 = jnp.sum(x * x, axis=1, keepdims=True)
    q = x * lax.rsqrt(jnp.maximum(nrm2, EPS * EPS))

    # cos_sim[b, k] = <q[b], n_K[k]>   -- single MXU pass
    cos = lax.dot_general(q, n_K, (((1,), (1,)), ((), ())),
                          preferred_element_type=jnp.float32)          # (TB, pool)

    # top-1 with first-index tie-break (matches torch.topk), built without a gather:
    pool = cos.shape[1]
    row_max = jnp.max(cos, axis=1, keepdims=True)                      # (TB, 1)
    col = lax.broadcasted_iota(jnp.int32, cos.shape, 1).astype(jnp.float32)
    first_idx = jnp.min(jnp.where(cos >= row_max, col, float(pool)),
                        axis=1, keepdims=True)                         # (TB, 1)
    one_hot = (col == first_idx).astype(jnp.float32)                   # (TB, pool)

    # exact row selection as a lane-dense MXU matmul
    o_ref[...] = jnp.dot(one_hot, p_flat,
                         preferred_element_type=jnp.float32).astype(o_ref.dtype)


def _select_prompt_pallas(x, n_K, p_flat, *, batch_tile=256):
    """x: (B, D) f32, n_K: (pool, D) f32, p_flat: (pool, L*E) f32 -> (B, L*E) f32."""
    B, D = x.shape
    pool, LE = p_flat.shape
    TB = B if B <= batch_tile else batch_tile        # TB <= 256 keeps v7x (64 MiB VMEM) happy
    grid = (pl.cdiv(B, TB),)

    flops = 2 * B * D * pool + 2 * B * pool * LE
    bytes_accessed = 4 * (B * D + pool * D + pool * LE + B * LE)

    return pl.pallas_call(
        dualprompt_e_kernel,
        out_shape=jax.ShapeDtypeStruct((B, LE), jnp.float32),
        grid_spec=pltpu.PrefetchScalarGridSpec(
            num_scalar_prefetch=0,
            grid=grid,
            in_specs=[
                pl.BlockSpec((TB, D), lambda i: (i, 0)),
                pl.BlockSpec((pool, D), lambda i: (0, 0)),    # VMEM-resident across batch tiles
                pl.BlockSpec((pool, LE), lambda i: (0, 0)),   # VMEM-resident across batch tiles
            ],
            out_specs=pl.BlockSpec((TB, LE), lambda i: (i, 0)),
        ),
        compiler_params=pltpu.CompilerParams(
            dimension_semantics=("parallel",)),
        cost_estimate=pl.CostEstimate(flops=flops, transcendentals=B,
                                      bytes_accessed=bytes_accessed),
    )(x, n_K, p_flat)


# ----------------------------------------------------------------------------
# Parameter init mimicking tensor_prompt (nn.init.uniform_ -> U[0,1)).
# Query-independent derived params (normalized keys, flattened prompts) are cached
# once at init so every forward avoids re-normalizing / reshaping the big tensors.
# ----------------------------------------------------------------------------
def init_dualprompt_params(key, emb_d, n_tasks, prompt_param, key_dim):
    e_pool_size = int(prompt_param[0])
    e_p_length = int(prompt_param[1])
    g_p_length = int(prompt_param[2])
    g_layers = [0, 1]
    e_layers = [2, 3, 4]
    params = {}
    for g in g_layers:
        key, kp = jax.random.split(key)
        params[f'g_p_{g}'] = jax.random.uniform(kp, (g_p_length, emb_d), dtype=jnp.float32)
    for e in e_layers:
        key, kp, kk = jax.random.split(key, 3)
        p = jax.random.uniform(kp, (e_pool_size, e_p_length, emb_d), dtype=jnp.float32)
        k = jax.random.uniform(kk, (e_pool_size, key_dim), dtype=jnp.float32)
        params[f'e_p_{e}'] = p
        params[f'e_k_{e}'] = k
        # cached, query-independent derived params (hoisted out of the kernel):
        params[f'e_nk_{e}'] = k / jnp.maximum(
            jnp.linalg.norm(k, axis=1, keepdims=True), EPS)
        params[f'e_p_flat_{e}'] = p.reshape(e_pool_size, e_p_length * emb_d)
    cfg = dict(emb_d=emb_d, key_d=key_dim, n_tasks=n_tasks, top_k=1,
               task_id_bootstrap=True, g_layers=g_layers, e_layers=e_layers,
               g_p_length=g_p_length, e_p_length=e_p_length,
               e_pool_size=e_pool_size, task_count=0)
    return params, cfg


# ----------------------------------------------------------------------------
# Forward (eval path). Slicing / broadcast glue stays in plain JAX; the cosine
# similarity + top-1 prompt selection runs in the Pallas kernel.
# ----------------------------------------------------------------------------
def dualprompt_forward(params, cfg, x_querry, l, x_block, train=False, task_id=None):
    p_return = None
    if l in cfg['e_layers']:
        B, C = x_querry.shape
        assert C == cfg['key_d']
        # TODO(synk): train-path (task_id_bootstrap loss, q.detach, top_k>1 gather) not
        # implemented; this kernel covers the inference path (train=False, top_k=1).
        P_flat = _select_prompt_pallas(
            x_querry.astype(jnp.float32),
            params[f'e_nk_{l}'],
            params[f'e_p_flat_{l}'],
        )
        P_ = P_flat.reshape(B, cfg['e_p_length'], cfg['emb_d'])
        i = cfg['e_p_length'] // 2
        p_return = [P_[:, :i, :], P_[:, i:, :]]          # [Ek, Ev]
    if l in cfg['g_layers']:
        B = x_querry.shape[0]
        j = cfg['g_p_length'] // 2
        gp = params[f'g_p_{l}']
        P_ = jnp.broadcast_to(gp[None], (B,) + gp.shape)  # torch .expand -> pure broadcast
        p_return = [P_[:, :j, :], P_[:, j:, :]]           # [Gk, Gv]
    # e_layers and g_layers are disjoint in this module, so the concat branch is unreachable.
    return p_return, 0, x_block


# ----------------------------------------------------------------------------
# Pure-JAX reference mirroring the PyTorch eval path, for a sanity check.
# ----------------------------------------------------------------------------
def _reference_forward(params, cfg, x, l):
    K = params[f'e_k_{l}']
    p = params[f'e_p_{l}']
    n_K = K / jnp.maximum(jnp.linalg.norm(K, axis=1, keepdims=True), EPS)
    q = x / jnp.maximum(jnp.linalg.norm(x, axis=1, keepdims=True), EPS)
    cos = q @ n_K.T
    k_idx = jnp.argmax(cos, axis=1)                       # top_k = 1
    P_ = p[k_idx]                                         # (B, L, E)
    i = cfg['e_p_length'] // 2
    return P_[:, :i, :], P_[:, i:, :]


if __name__ == "__main__":
    # Small shapes consistent with the module's forward:
    emb_d = 32          # prompt embedding dim
    key_dim = 32        # query feature dim C (must match x_querry's last dim)
    n_tasks = 2
    prompt_param = [8, 8, 6]   # e_pool_size=8, e_p_length=8, g_p_length=6
    B = 2

    root = jax.random.PRNGKey(0)
    kp, kx, kb = jax.random.split(root, 3)
    params, cfg = init_dualprompt_params(kp, emb_d, n_tasks, prompt_param, key_dim)
    x_querry = jax.random.normal(kx, (B, key_dim), dtype=jnp.float32)
    x_block = jax.random.normal(kb, (B, 16, emb_d), dtype=jnp.float32)

    # e-layer path (Pallas kernel)
    (Ek, Ev), loss_e, _ = dualprompt_forward(params, cfg, x_querry, 2, x_block, train=False)
    Ek = jax.block_until_ready(Ek)
    Ev = jax.block_until_ready(Ev)
    rEk, rEv = _reference_forward(params, cfg, x_querry, 2)
    assert Ek.shape == (B, prompt_param[1] // 2, emb_d)
    assert Ev.shape == (B, prompt_param[1] // 2, emb_d)
    assert jnp.allclose(Ek, rEk, atol=1e-6, rtol=1e-6)
    assert jnp.allclose(Ev, rEv, atol=1e-6, rtol=1e-6)
    assert loss_e == 0

    # g-layer path (broadcast only, no kernel needed)
    (Gk, Gv), loss_g, xb = dualprompt_forward(params, cfg, x_querry, 0, x_block, train=False)
    Gk = jax.block_until_ready(Gk)
    j = prompt_param[2] // 2
    assert Gk.shape == (B, j, emb_d)
    assert Gv.shape == (B, prompt_param[2] - j, emb_d)
    assert jnp.allclose(Gk, jnp.broadcast_to(params['g_p_0'][None, :j], Gk.shape))

    print("KERNEL_OK")
</pallas_src>

<mosaic_0001>
module attributes {stable_mosaic.version = 11 : i64} {
  func.func @dualprompt_e_kernel(%arg0: i32, %arg1: memref<2x32xf32, #tpu.memory_space<vmem>>, %arg2: memref<8x32xf32, #tpu.memory_space<vmem>>, %arg3: memref<8x256xf32, #tpu.memory_space<vmem>>, %arg4: memref<2x256xf32, #tpu.memory_space<vmem>>) attributes {dimension_semantics = [#tpu.dimension_semantics<parallel>], iteration_bounds = array<i64: 1>, scalar_prefetch = 0 : i64, scratch_operands = 0 : i64, tpu.core_type = #tpu.core_type<tc>, window_params = [{transform_indices = @transform_0, window_bounds = array<i64: 2, 32>}, {pipeline_mode = #tpu.pipeline_mode<synchronous>, transform_indices = @transform_1, window_bounds = array<i64: 8, 32>}, {pipeline_mode = #tpu.pipeline_mode<synchronous>, transform_indices = @transform_2, window_bounds = array<i64: 8, 256>}, {transform_indices = @transform_3, window_bounds = array<i64: 2, 256>}]} {
    %c0 = arith.constant 0 : index
    %c0_0 = arith.constant 0 : index
    %0 = vector.load %arg1[%c0, %c0_0] : memref<2x32xf32, #tpu.memory_space<vmem>>, vector<2x32xf32>
    %c0_1 = arith.constant 0 : index
    %c0_2 = arith.constant 0 : index
    %1 = vector.load %arg2[%c0_1, %c0_2] : memref<8x32xf32, #tpu.memory_space<vmem>>, vector<8x32xf32>
    %c0_3 = arith.constant 0 : index
    %c0_4 = arith.constant 0 : index
    %2 = vector.load %arg3[%c0_3, %c0_4] : memref<8x256xf32, #tpu.memory_space<vmem>>, vector<8x256xf32>
    %3 = arith.mulf %0, %0 : vector<2x32xf32>
    %cst = arith.constant dense<0.000000e+00> : vector<2xf32>
    %4 = vector.multi_reduction <add>, %3, %cst [1] : vector<2x32xf32> to vector<2xf32>
    %5 = vector.shape_cast %4 : vector<2xf32> to vector<2x1xf32>
    %cst_5 = arith.constant 1.000000e-24 : f32
    %6 = vector.broadcast %cst_5 : f32 to vector<2x1xf32>
    %7 = arith.maximumf %5, %6 : vector<2x1xf32>
    %8 = math.rsqrt %7 : vector<2x1xf32>
    %9 = vector.broadcast %8 : vector<2x1xf32> to vector<2x32xf32>
    %10 = arith.mulf %0, %9 : vector<2x32xf32>
    %cst_6 = arith.constant dense<0.000000e+00> : vector<2x8xf32>
    %11 = tpu.matmul %10, %1, %cst_6 {dimension_numbers = #tpu.dot_dimension_numbers<[1], [1], [0], [0], [0, 0, 1, 0], [], []>} : vector<2x32xf32>, vector<8x32xf32>, vector<2x8xf32> -> vector<2x8xf32>
    %cst_7 = arith.constant dense<0xFF800000> : vector<2xf32>
    %12 = vector.multi_reduction <maximumf>, %11, %cst_7 [1] : vector<2x8xf32> to vector<2xf32>
    %13 = vector.shape_cast %12 : vector<2xf32> to vector<2x1xf32>
    %14 = tpu.iota {dimensions = array<i32: 1>} : vector<2x8xi32>
    %15 = arith.sitofp %14 : vector<2x8xi32> to vector<2x8xf32>
    %16 = vector.broadcast %13 : vector<2x1xf32> to vector<2x8xf32>
    %17 = arith.cmpf oge, %11, %16 : vector<2x8xf32>
    %cst_8 = arith.constant 8.000000e+00 : f32
    %18 = vector.broadcast %cst_8 : f32 to vector<2x8xf32>
    %19 = arith.select %17, %15, %18 : vector<2x8xi1>, vector<2x8xf32>
    %cst_9 = arith.constant dense<0x7F800000> : vector<2xf32>
    %20 = vector.multi_reduction <minimumf>, %19, %cst_9 [1] : vector<2x8xf32> to vector<2xf32>
    %21 = vector.shape_cast %20 : vector<2xf32> to vector<2x1xf32>
    %22 = vector.broadcast %21 : vector<2x1xf32> to vector<2x8xf32>
    %23 = arith.cmpf oeq, %15, %22 : vector<2x8xf32>
    %24 = arith.extui %23 : vector<2x8xi1> to vector<2x8xi32>
    %25 = arith.sitofp %24 : vector<2x8xi32> to vector<2x8xf32>
    %cst_10 = arith.constant dense<0.000000e+00> : vector<2x256xf32>
    %26 = tpu.matmul %25, %2, %cst_10 {dimension_numbers = #tpu.dot_dimension_numbers<[1], [0], [0], [1], [0, 0, 1, 1], [], []>} : vector<2x8xf32>, vector<8x256xf32>, vector<2x256xf32> -> vector<2x256xf32>
    %c0_11 = arith.constant 0 : index
    %c0_12 = arith.constant 0 : index
    %27 = vector.load %arg4[%c0_11, %c0_12] : memref<2x256xf32, #tpu.memory_space<vmem>>, vector<2x256xf32>
    tpu.vector_store %arg4[%c0_11, %c0_12], %26 {strides = array<i32>} : memref<2x256xf32, #tpu.memory_space<vmem>>, vector<2x256xf32>,
    return
  }
  func.func @transform_0(%arg0: i32) -> (i32, i32) {
    %c0_i32 = arith.constant 0 : i32
    %c0_i32_0 = arith.constant 0 : i32
    return %arg0, %c0_i32 : i32, i32
  }
  func.func @transform_1(%arg0: i32) -> (i32, i32) {
    %c0_i32 = arith.constant 0 : i32
    %c0_i32_0 = arith.constant 0 : i32
    %c0_i32_1 = arith.constant 0 : i32
    return %c0_i32, %c0_i32_0 : i32, i32
  }
  func.func @transform_2(%arg0: i32) -> (i32, i32) {
    %c0_i32 = arith.constant 0 : i32
    %c0_i32_0 = arith.constant 0 : i32
    %c0_i32_1 = arith.constant 0 : i32
    return %c0_i32, %c0_i32_0 : i32, i32
  }
  func.func @transform_3(%arg0: i32) -> (i32, i32) {
    %c0_i32 = arith.constant 0 : i32
    %c0_i32_0 = arith.constant 0 : i32
    return %arg0, %c0_i32 : i32, i32
  }
}

</mosaic_0001>

<llo_original>
// kernel: tpu_custom_call.1
$region0: #{tpu_custom_call.1}
  #allocation0 [shape = 'u32[]', space=smem, size = 0x4, offset = 0x4, fixed_abs, tag = 'smem constant byte address 0x4 - core index']
  #allocation1 [shape = 'u32[144,128]{1,0:T(1,128)}', space=vmem, size = 0x12000, scoped, tag = 'internal scratch']
  %s0 = inlined_call_operand.hbm [shape: f32[2,32], index: 0, kind: input, shape index: {}]
  %s1 = inlined_call_operand.hbm [shape: f32[8,32], index: 1, kind: input, shape index: {}]
  %s2 = inlined_call_operand.hbm [shape: f32[8,256], index: 2, kind: input, shape index: {}]
  %s3 = inlined_call_operand.hbm [shape: f32[2,256], index: 3, kind: output, shape index: {}]
  %s4 = sld [smem:[#allocation0]]
  $region34: #{tpu_custom_call.1} parent=0
    _
  %s6 = ssub.s32 1, %s4
  %s7 = scalar_select 0, %s6, %s4
  $region1: #{tpu_custom_call.1} parent=0
    #allocation2 [shape = 'u8[1024]{0}', space=vmem, size = 0x400, scoped, tag = 'input window, operand 0, single buffered']
    #allocation3 [shape = 's32[1]{0}', space=sflag, size = 0x4, scoped, tag = 'scoped memory for tpu_custom_call.1']
    #allocation4 [shape = 's32[1]{0}', space=sflag, size = 0x4, scoped, tag = 'scoped memory for tpu_custom_call.1']
    #allocation5 [shape = 'u8[4096]{0}', space=vmem, size = 0x1000, scoped, tag = 'input window, operand 1, single buffered']
    #allocation6 [shape = 's32[1]{0}', space=sflag, size = 0x4, scoped, tag = 'scoped memory for tpu_custom_call.1']
    #allocation7 [shape = 'u8[8192]{0}', space=vmem, size = 0x2000, scoped, tag = 'input window, operand 2, single buffered']
    #allocation8 [shape = 'u8[2048]{0}', space=vmem, size = 0x800, scoped, tag = 'output window, operand 0, single buffered']
    %8 = vsyncpa [#allocation3], 0
    %9 = vsyncpa [#allocation6], 0
    %10 = vsyncpa [#allocation4], 0
    // Predicated region
    $region2: #{tpu_custom_call.1} parent=1 // pred_check
      _
    $region3: #{tpu_custom_call.1} parent=1 // pred_check_branch
      %12 = sbr.rel (0) target = $region5
    $region4: #{tpu_custom_call.1} parent=1 // pred_region
      %s14 = ssub.s32 32, 32
      %15 = vsyncadd [#allocation3], %s14
      %s17 = sshll.u32 [#allocation2], 4
      %s18 = int_to_ptr.vmem [resolvable:$true] %s17
      %20 = dma.hbm_to_vmem [thread:$0]  %s0, 32, %s18, [#allocation3]
    $region5: #{tpu_custom_call.1} parent=1 // pred_fallthru
      _
    // Predicated region
    $region6: #{tpu_custom_call.1} parent=1 // pred_check
      _
    $region7: #{tpu_custom_call.1} parent=1 // pred_check_branch
      %22 = sbr.rel (0) target = $region9
    $region8: #{tpu_custom_call.1} parent=1 // pred_region
      %s24 = ssub.s32 128, 128
      %25 = vsyncadd [#allocation6], %s24
      %s27 = sshll.u32 [#allocation5], 4
      %s28 = int_to_ptr.vmem [resolvable:$true] %s27
      %30 = dma.hbm_to_vmem [thread:$0]  %s1, 128, %s28, [#allocation6]
    $region9: #{tpu_custom_call.1} parent=1 // pred_fallthru
      _
    // Predicated region
    $region10: #{tpu_custom_call.1} parent=1 // pred_check
      _
    $region11: #{tpu_custom_call.1} parent=1 // pred_check_branch
      %32 = sbr.rel (0) target = $region13
    $region12: #{tpu_custom_call.1} parent=1 // pred_region
      %s34 = ssub.s32 256, 256
      %35 = vsyncadd [#allocation6], %s34
      %s37 = sshll.u32 [#allocation7], 4
      %s38 = int_to_ptr.vmem [resolvable:$true] %s37
      %40 = dma.hbm_to_vmem [thread:$0]  %s2, 256, %s38, [#allocation6]
    $region13: #{tpu_custom_call.1} parent=1 // pred_fallthru
      _
    // Predicated region
    $region14: #{tpu_custom_call.1} parent=1 // pred_check
      _
    $region15: #{tpu_custom_call.1} parent=1 // pred_check_branch
      %42 = sbr.rel (0) target = $region17
    $region16: #{tpu_custom_call.1} parent=1 // pred_region
      %43 = dma.done [#allocation3], 32
    $region17: #{tpu_custom_call.1} parent=1 // pred_fallthru
      _
    // Predicated region
    $region18: #{tpu_custom_call.1} parent=1 // pred_check
      _
    $region19: #{tpu_custom_call.1} parent=1 // pred_check_branch
      %45 = sbr.rel (0) target = $region21
    $region20: #{tpu_custom_call.1} parent=1 // pred_region
      %46 = dma.done [#allocation6], 128
    $region21: #{tpu_custom_call.1} parent=1 // pred_fallthru
      _
    // Predicated region
    $region22: #{tpu_custom_call.1} parent=1 // pred_check
      _
    $region23: #{tpu_custom_call.1} parent=1 // pred_check_branch
      %48 = sbr.rel (0) target = $region25
    $region24: #{tpu_custom_call.1} parent=1 // pred_region
      %49 = dma.done [#allocation6], 256
    $region25: #{tpu_custom_call.1} parent=1 // pred_fallthru
      _
    %v50 = vld [vmem:[#allocation2] sm:$0x3]
    %v51 = vld [vmem:[#allocation5] sm:$0xff]
    %v52 = vld [vmem:[#allocation7] sm:$0xff]
    %v53 = vld [vmem:[#allocation7 + $0x8] sm:$0xff]
    %v54 = vmul.f32 %v50, %v50
    %vm55 = vcmask 254976
    %v56 = vsel %vm55, %v54, 0.0
    %57 = vadd.xlane.f32.xlu0 %v56
    %v58 = vpop.xlane.xlu0 %57
    %v59 = vmax.f32 %v58, 1e-24
    %v60 = vrsqrt.pop %v59
    %v61 = vmul.f32 %v50, %v60
    %vm62 = vcmask 261120
    %v64 = vsel %vm62, %v61, 0
    %v67 = vsel %vm62, %v51, 0
    %69 = vmatprep.subr.mxu0 0.0
    %70 = vmatpush1.xpose.msra.mxu0 0.0
    %71 = vmatprep.subr.mxu0 0.0
    %72 = vmatpush1.xpose.msra.mxu0 0.0
    %73 = vmatprep.subr.mxu0 0.0
    %74 = vmatpush1.xpose.msra.mxu0 0.0
    %75 = vmatprep.subr.mxu0 0.0
    %76 = vmatpush1.xpose.msra.mxu0 0.0
    %77 = vmatprep.subr.mxu0 0.0
    %78 = vmatpush1.xpose.msra.mxu0 0.0
    %79 = vmatprep.subr.mxu0 0.0
    %80 = vmatpush1.xpose.msra.mxu0 0.0
    %81 = vmatprep.subr.mxu0 0.0
    %82 = vmatpush1.xpose.msra.mxu0 0.0
    %83 = vmatprep.subr.mxu0 0.0
    %84 = vmatpush1.xpose.msra.mxu0 0.0
    %85 = vmatprep.subr.mxu0 0.0
    %86 = vmatpush1.xpose.msra.mxu0 0.0
    %87 = vmatprep.subr.mxu0 0.0
    %88 = vmatpush1.xpose.msra.mxu0 0.0
    %89 = vmatprep.subr.mxu0 0.0
    %90 = vmatpush1.xpose.msra.mxu0 0.0
    %91 = vmatprep.subr.mxu0 0.0
    %92 = vmatpush1.xpose.msra.mxu0 0.0
    %93 = vmatprep.subr.mxu0 0.0
    %94 = vmatpush1.xpose.msra.mxu0 0.0
    %95 = vmatprep.subr.mxu0 0.0
    %96 = vmatpush1.xpose.msra.mxu0 0.0
    %97 = vmatprep.subr.mxu0 0.0
    %98 = vmatpush1.xpose.msra.mxu0 0.0
    %99 = vmatprep.subr.mxu0 0.0
    %100 = vmatpush1.xpose.msra.mxu0 %v67
    %101 = vmatprep.subr.mxu0 0.0
    %102 = vmatpush2.xpose.msra.mxu0 0.0
    %103 = vmatprep.subr.mxu0 0.0
    %104 = vmatpush2.xpose.msra.mxu0 0.0
    %105 = vmatprep.subr.mxu0 0.0
    %106 = vmatpush2.xpose.msra.mxu0 0.0
    %107 = vmatprep.subr.mxu0 0.0
    %108 = vmatpush2.xpose.msra.mxu0 0.0
    %109 = vmatprep.subr.mxu0 0.0
    %110 = vmatpush2.xpose.msra.mxu0 0.0
    %111 = vmatprep.subr.mxu0 0.0
    %112 = vmatpush2.xpose.msra.mxu0 0.0
    %113 = vmatprep.subr.mxu0 0.0
    %114 = vmatpush2.xpose.msra.mxu0 0.0
    %115 = vmatprep.subr.mxu0 0.0
    %116 = vmatpush2.xpose.msra.mxu0 0.0
    %117 = vmatprep.subr.mxu0 0.0
    %118 = vmatpush2.xpose.msra.mxu0 0.0
    %119 = vmatprep.subr.mxu0 0.0
    %120 = vmatpush2.xpose.msra.mxu0 0.0
    %121 = vmatprep.subr.mxu0 0.0
    %122 = vmatpush2.xpose.msra.mxu0 0.0
    %123 = vmatprep.subr.mxu0 0.0
    %124 = vmatpush2.xpose.msra.mxu0 0.0
    %125 = vmatprep.subr.mxu0 0.0
    %126 = vmatpush2.xpose.msra.mxu0 0.0
    %127 = vmatprep.subr.mxu0 0.0
    %128 = vmatpush2.xpose.msra.mxu0 0.0
    %129 = vmatprep.subr.mxu0 0.0
    %130 = vmatpush2.xpose.msra.mxu0 0.0
    %131 = vmatprep.subr.mxu0 0.0
    %132 = vmatpush2.xpose.msra.mxu0 0.0
    %133 = vmatprep.mubr.f32.mxu0 0.0
    %134 = vmatmul.mubr.f32.gmra.mxu0 %v64
    %v135 = vpop.f32.mrf.mxu0
    %v136 = vadd.f32 0.0, %v135
    %v137 = vpop.f32.mrf.mxu0
    %138 = vdwg.mxu0
    %vm139 = vcmask 58368
    %v140 = vsel %vm139, %v136, -inf
    %141 = vmax.xlane.f32.xlu0 %v140
    %v142 = vpop.xlane.xlu0 %141
    %v143 = vlaneseq
    %v144 = vand.u32 %v143, 127
    %v145 = vcvt.s32.f32 %v144
    %vm146 = vcmp.ge.f32.partialorder %v136, %v142
    %v147 = vsel %vm146, %v145, 8.0
    %v148 = vsel %vm139, %v147, inf
    %149 = vmin.xlane.f32.xlu0 %v148
    %v150 = vpop.xlane.xlu0 %149
    %vm151 = vcmp.eq.f32.partialorder %v145, %v150
    %v152 = vsel %vm151, 1, 0
    %v153 = vcvt.s32.f32 %v152
    %vm154 = vcmask 64512
    %v156 = vsel %vm154, %v153, 0
    %158 = vmatprep.subr.mxu0 0.0
    %159 = vmatpush1.msra.mxu0 0.0
    %160 = vmatprep.subr.mxu0 0.0
    %161 = vmatpush1.msra.mxu0 0.0
    %162 = vmatprep.subr.mxu0 0.0
    %163 = vmatpush1.msra.mxu0 0.0
    %164 = vmatprep.subr.mxu0 0.0
    %165 = vmatpush1.msra.mxu0 0.0
    %166 = vmatprep.subr.mxu0 0.0
    %167 = vmatpush1.msra.mxu0 0.0
    %168 = vmatprep.subr.mxu0 0.0
    %169 = vmatpush1.msra.mxu0 0.0
    %170 = vmatprep.subr.mxu0 0.0
    %171 = vmatpush1.msra.mxu0 0.0
    %172 = vmatprep.subr.mxu0 0.0
    %173 = vmatpush1.msra.mxu0 0.0
    %174 = vmatprep.subr.mxu0 0.0
    %175 = vmatpush1.msra.mxu0 0.0
    %176 = vmatprep.subr.mxu0 0.0
    %177 = vmatpush1.msra.mxu0 0.0
    %178 = vmatprep.subr.mxu0 0.0
    %179 = vmatpush1.msra.mxu0 0.0
    %180 = vmatprep.subr.mxu0 0.0
    %181 = vmatpush1.msra.mxu0 0.0
    %182 = vmatprep.subr.mxu0 0.0
    %183 = vmatpush1.msra.mxu0 0.0
    %184 = vmatprep.subr.mxu0 0.0
    %185 = vmatpush1.msra.mxu0 0.0
    %186 = vmatprep.subr.mxu0 0.0
    %187 = vmatpush1.msra.mxu0 0.0
    %188 = vmatprep.subr.mxu0 %v53
    %189 = vmatpush1.msra.mxu0 %v52
    %190 = vmatprep.subr.mxu0 0.0
    %191 = vmatpush2.msra.mxu0 0.0
    %192 = vmatprep.subr.mxu0 0.0
    %193 = vmatpush2.msra.mxu0 0.0
    %194 = vmatprep.subr.mxu0 0.0
    %195 = vmatpush2.msra.mxu0 0.0
    %196 = vmatprep.subr.mxu0 0.0
    %197 = vmatpush2.msra.mxu0 0.0
    %198 = vmatprep.subr.mxu0 0.0
    %199 = vmatpush2.msra.mxu0 0.0
    %200 = vmatprep.subr.mxu0 0.0
    %201 = vmatpush2.msra.mxu0 0.0
    %202 = vmatprep.subr.mxu0 0.0
    %203 = vmatpush2.msra.mxu0 0.0
    %204 = vmatprep.subr.mxu0 0.0
    %205 = vmatpush2.msra.mxu0 0.0
    %206 = vmatprep.subr.mxu0 0.0
    %207 = vmatpush2.msra.mxu0 0.0
    %208 = vmatprep.subr.mxu0 0.0
    %209 = vmatpush2.msra.mxu0 0.0
    %210 = vmatprep.subr.mxu0 0.0
    %211 = vmatpush2.msra.mxu0 0.0
    %212 = vmatprep.subr.mxu0 0.0
    %213 = vmatpush2.msra.mxu0 0.0
    %214 = vmatprep.subr.mxu0 0.0
    %215 = vmatpush2.msra.mxu0 0.0
    %216 = vmatprep.subr.mxu0 0.0
    %217 = vmatpush2.msra.mxu0 0.0
    %218 = vmatprep.subr.mxu0 0.0
    %219 = vmatpush2.msra.mxu0 0.0
    %220 = vmatprep.subr.mxu0 0.0
    %221 = vmatpush2.msra.mxu0 0.0
    %222 = vmatprep.mubr.f32.mxu0 0.0
    %223 = vmatmul.mubr.f32.gmra.mxu0 %v156
    %v224 = vpop.f32.mrf.mxu0
    %v225 = vadd.f32 0.0, %v224
    %v226 = vpop.f32.mrf.mxu0
    %v227 = vadd.f32 0.0, %v226
    %228 = vdwg.mxu0
    %v231 = vcombine.low %v225, %v227
    %v233 = vunpack.c.l.s4 1983009808
    %v234 = vunpack.c.0.s8 %v233
    %v235 = vlaneseq
    %v236 = vshrl.u32 %v235, 7
    %v237 = vsub.s32 %v234, %v236
    %v238 = vrot.slane %v231, %v237
    %240 = vst [vmem:[#allocation8] sm:$0xf] %v238
    // Predicated region
    $region26: #{tpu_custom_call.1} parent=1 // pred_check
      _
    $region27: #{tpu_custom_call.1} parent=1 // pred_check_branch
      %242 = sbr.rel (0) target = $region29
    $region28: #{tpu_custom_call.1} parent=1 // pred_region
      %s244 = ssub.s32 64, 64
      %245 = vsyncadd [#allocation4], %s244
      %s247 = sshll.u32 [#allocation8], 4
      %s248 = int_to_ptr.vmem [resolvable:$true] %s247
      %250 = dma.vmem_to_hbm [thread:$0]  %s248, 64, %s3, [#allocation4]
    $region29: #{tpu_custom_call.1} parent=1 // pred_fallthru
      _
    // Predicated region
    $region30: #{tpu_custom_call.1} parent=1 // pred_check
      _
    $region31: #{tpu_custom_call.1} parent=1 // pred_check_branch
      %252 = sbr.rel (0) target = $region33
    $region32: #{tpu_custom_call.1} parent=1 // pred_region
      %253 = dma.done [#allocation4], 64
    $region33: #{tpu_custom_call.1} parent=1 // pred_fallthru
      _
    %254 = vsyncpa [#allocation3], 1
    %255 = vsyncpa [#allocation6], 1
    %256 = vsyncpa [#allocation4], 1

</llo_original>
